<compile_context>
chip_gen: v6e
topology: v6e:2x2x1
jax: 0.10.0
libtpu: 0.0.40
codegen_flags: <defaults>
</compile_context>

<pallas_src>
import functools

import jax
import jax.numpy as jnp
from jax.experimental import pallas as pl
from jax.experimental.pallas import tpu as pltpu


_SINGLE_BUFFER_BYTES = 2 * 1024 * 1024  # resident blocks larger than this -> Buffered(1)


def _round_up(x, m):
    return (x + m - 1) // m * m


def _lane_round(d):
    # Lane-dense padding.  Prefer 256-aligned K/N for very wide dims
    # (v6e/v7x 2x256 MXUs, waste <= 12.5%); 128 otherwise (v5e MXU width).
    return _round_up(d, 256) if d >= 1024 else _round_up(d, 128)


def _vmem_limit_bytes():
    # Generation-aware scoped-VMEM limit: ~80% of physical, >= 32 MiB.
    try:
        cap = pltpu.get_tpu_info().vmem_capacity_bytes
        return max(32 * 1024 * 1024, int(cap * 0.8))
    except Exception:
        return 48 * 1024 * 1024


def _default_batch_tile():
    # 512-row tiles on 128-MiB-VMEM parts (v5e/v6e), 256 on 64-MiB v7x.
    try:
        cap = pltpu.get_tpu_info().vmem_capacity_bytes
    except Exception:
        cap = 64 * 1024 * 1024
    return 512 if cap >= 100 * 1024 * 1024 else 256


def _choose_tb(B, batch_tile):
    # Sublane-8 alignment for small B, 128-aligned (MXU-dense) for large B.
    align = 128 if B >= 256 else 8
    tb = min(_round_up(batch_tile, align), _round_up(B, align))
    # Ensure >= 2 grid steps when the batch allows it (so the "parallel" batch
    # axis actually shards across both v7x TensorCores and the pipeline has
    # something to overlap).
    if B >= 2 * align:
        tb = min(tb, _round_up(-(-B // 2), align))
    return tb


def _resident_spec(block_shape, nbytes):
    # Constant-index (VMEM-resident) block.  Large blocks only need one
    # buffer; request Buffered(1) to halve their VMEM footprint.
    index_map = lambda i: (0,) * len(block_shape)
    if nbytes >= _SINGLE_BUFFER_BYTES:
        try:
            return pl.BlockSpec(block_shape, index_map, pipeline_mode=pl.Buffered(1))
        except (TypeError, AttributeError):
            pass
    return pl.BlockSpec(block_shape, index_map)


# ---------------------------------------------------------------------------
# Pass 1: h = x @ W1 (bf16 MXU, f32 accumulate).  Emits h (staged in bf16) and
# per-tile shifted statistics [sum, centered-M2] in f32 from the accumulator.
# The Linear-1 bias is intentionally omitted: train-mode BatchNorm subtracts
# the batch mean immediately, so the bias cancels exactly; zero-padded x rows
# therefore produce exactly-zero h rows and are masked out of M2.
# ---------------------------------------------------------------------------
def _linear1_stats_kernel(x_ref, w1_ref, h_ref, stats_ref, *, true_b, tile_b):
    i = pl.program_id(0)
    x = x_ref[...].astype(jnp.bfloat16)               # VPU cast hidden under the MXU
    h = jnp.dot(x, w1_ref[...], preferred_element_type=jnp.float32)

    # Real (non-padding) rows in this tile.
    n_rows = jnp.minimum(tile_b, true_b - i * tile_b)
    nf = n_rows.astype(jnp.float32)

    s = jnp.sum(h, axis=0, keepdims=True)              # padded rows are exactly 0
    mu = s / nf                                        # per-tile mean (shifted sums)
    row = jax.lax.broadcasted_iota(jnp.int32, h.shape, 0)
    mask = (row < n_rows).astype(jnp.float32)
    d = (h - mu) * mask
    m2 = jnp.sum(d * d, axis=0, keepdims=True)         # per-tile centered SSQ

    pad = jnp.zeros((6, h.shape[1]), jnp.float32)      # 8-sublane unmasked store
    stats_ref[...] = jnp.concatenate([s, m2, pad], axis=0)[None]

    h_ref[...] = h.astype(jnp.bfloat16)                # bf16 staging (stats already f32)


# ---------------------------------------------------------------------------
# Pass 2: y = relu(h * scale + shift) @ W2 + b2   (BN affine folded into FMA).
# ---------------------------------------------------------------------------
def _bn_relu_linear2_kernel(h_ref, scale_ref, shift_ref, w2_ref, b2_ref, o_ref):
    hn = h_ref[...].astype(jnp.float32) * scale_ref[...] + shift_ref[...]  # f32 FMA
    hn = jnp.maximum(hn, 0.0)
    out = jnp.dot(hn.astype(jnp.bfloat16), w2_ref[...],
                  preferred_element_type=jnp.float32)
    o_ref[...] = out + b2_ref[...]


def prepare_params(w1, gamma, beta, w2, b2):
    """Pad & cast parameters ONCE (outside the per-step forward path).

    w1: (C, H) pre-transposed (in, out); Linear-1 bias cancels under BN.
    Returns (w1p, gp, bp, w2p, b2p) lane-dense padded arrays.
    """
    C, H = w1.shape
    P = w2.shape[1]
    Cp, Hp, Pp = _lane_round(C), _lane_round(H), _lane_round(P)
    f32, bf16 = jnp.float32, jnp.bfloat16
    w1p = jnp.zeros((Cp, Hp), bf16).at[:C, :H].set(w1.astype(bf16))
    w2p = jnp.zeros((Hp, Pp), bf16).at[:H, :P].set(w2.astype(bf16))
    gp = jnp.zeros((1, Hp), f32).at[:, :H].set(gamma.reshape(1, H).astype(f32))
    bp = jnp.zeros((1, Hp), f32).at[:, :H].set(beta.reshape(1, H).astype(f32))
    b2p = jnp.zeros((1, Pp), f32).at[:, :P].set(b2.reshape(1, P).astype(f32))
    return w1p, gp, bp, w2p, b2p


@functools.partial(jax.jit, static_argnames=("out_dim", "eps", "batch_tile"))
def mlp_head_forward(x, w1p, gp, bp, w2p, b2p, *, out_dim, eps=1e-5, batch_tile=None):
    """Forward pass of MLPHead (train-mode BatchNorm1d) on pre-padded params."""
    B, C = x.shape
    Cp, Hp = w1p.shape
    Pp = w2p.shape[1]

    if batch_tile is None:
        batch_tile = _default_batch_tile()
    TB = _choose_tb(B, batch_tile)
    Bp = _round_up(B, TB)
    nb = Bp // TB

    f32 = jnp.float32
    itemsize = lambda a: a.size * jnp.dtype(a.dtype).itemsize

    # x: pass f32 straight through when tile-aligned (cast to bf16 in-kernel);
    # pad (zero rows/cols) only for ragged shapes.
    if Bp == B and Cp == C:
        xp = x
    else:
        xp = jnp.zeros((Bp, Cp), x.dtype).at[:B, :C].set(x)

    vmem_limit = _vmem_limit_bytes()

    # ---- Pass 1: Linear1 + per-tile shifted batch statistics ----------------
    cost1 = pl.CostEstimate(
        flops=2 * Bp * Cp * Hp,
        transcendentals=0,
        bytes_accessed=int(itemsize(xp) + itemsize(w1p) + Bp * Hp * 2 + nb * 8 * Hp * 4),
    )
    h_staged, stats = pl.pallas_call(
        functools.partial(_linear1_stats_kernel, true_b=B, tile_b=TB),
        out_shape=(
            jax.ShapeDtypeStruct((Bp, Hp), jnp.bfloat16),   # bf16-staged h
            jax.ShapeDtypeStruct((nb, 8, Hp), f32),         # [sum, M2] per tile
        ),
        grid=(nb,),
        in_specs=[
            pl.BlockSpec((TB, Cp), lambda i: (i, 0)),       # activation tiles (pipelined)
            _resident_spec((Cp, Hp), itemsize(w1p)),        # W1 VMEM-resident
        ],
        out_specs=(
            pl.BlockSpec((TB, Hp), lambda i: (i, 0)),
            pl.BlockSpec((1, 8, Hp), lambda i: (i, 0, 0)),
        ),
        compiler_params=pltpu.CompilerParams(
            dimension_semantics=("parallel",),
            vmem_limit_bytes=vmem_limit,
        ),
        cost_estimate=cost1,
    )(xp, w1p)

    # ---- Global BN reduction (Chan combine) & affine fold (tiny JAX) --------
    s_t = stats[:, 0, :]                                   # (nb, Hp) per-tile sums
    m2_t = stats[:, 1, :]                                  # (nb, Hp) per-tile centered SSQ
    n_t = jnp.minimum(TB, B - jnp.arange(nb) * TB).astype(f32)[:, None]  # real rows/tile
    total = jnp.float32(B)
    mean = jnp.sum(s_t, axis=0, keepdims=True) / total     # (1, Hp)
    mu_t = s_t / n_t
    m2 = (jnp.sum(m2_t, axis=0, keepdims=True)
          + jnp.sum(n_t * (mu_t - mean) ** 2, axis=0, keepdims=True))
    var = m2 / total                                       # biased (train-mode) variance
    inv = jax.lax.rsqrt(var + eps)
    scale = gp * inv                                       # (1, Hp)
    shift = bp - mean * scale                              # (1, Hp)

    # ---- Pass 2: normalize (FMA) + ReLU + Linear2 ----------------------------
    cost2 = pl.CostEstimate(
        flops=2 * Bp * Hp * Pp + 3 * Bp * Hp,
        transcendentals=0,
        bytes_accessed=int(Bp * Hp * 2 + itemsize(w2p) + Bp * Pp * 4 + 3 * Hp * 4),
    )
    out = pl.pallas_call(
        _bn_relu_linear2_kernel,
        out_shape=jax.ShapeDtypeStruct((Bp, Pp), f32),
        grid=(nb,),
        in_specs=[
            pl.BlockSpec((TB, Hp), lambda i: (i, 0)),       # bf16 h tiles (pipelined)
            pl.BlockSpec((1, Hp), lambda i: (0, 0)),        # scale resident (tiny)
            pl.BlockSpec((1, Hp), lambda i: (0, 0)),        # shift resident (tiny)
            _resident_spec((Hp, Pp), itemsize(w2p)),        # W2 resident
            pl.BlockSpec((1, Pp), lambda i: (0, 0)),        # b2 resident (tiny)
        ],
        out_specs=pl.BlockSpec((TB, Pp), lambda i: (i, 0)), # lane-dense stores
        compiler_params=pltpu.CompilerParams(
            dimension_semantics=("parallel",),
            vmem_limit_bytes=vmem_limit,
        ),
        cost_estimate=cost2,
    )(h_staged, scale, shift, w2p, b2p)

    return out[:B, :out_dim]


def make_params(key, in_channels, mlp_hidden, projection_size):
    """Deterministic init mirroring the PyTorch module: kaiming_normal_
    (fan_in, std = sqrt(2/fan_in)) for Linear weights, zero biases,
    BatchNorm1d gamma=1 / beta=0.  Weights returned pre-transposed (in, out)."""
    hidden = round(mlp_hidden * in_channels)
    k1, k2 = jax.random.split(key)

    std1 = (2.0 / in_channels) ** 0.5
    w1 = jax.random.normal(k1, (in_channels, hidden), jnp.float32) * std1
    b1 = jnp.zeros((1, hidden), jnp.float32)   # cancels under train-mode BN

    gamma = jnp.ones((1, hidden), jnp.float32)
    beta = jnp.zeros((1, hidden), jnp.float32)

    std2 = (2.0 / hidden) ** 0.5
    w2 = jax.random.normal(k2, (hidden, projection_size), jnp.float32) * std2
    b2 = jnp.zeros((1, projection_size), jnp.float32)

    return w1, b1, gamma, beta, w2, b2


def _reference(x, w1, b1, gamma, beta, w2, b2, eps=1e-5):
    # Pure-JAX reference (train-mode BN) with the same bf16 MXU casts.
    h = jnp.dot(x.astype(jnp.bfloat16), w1.astype(jnp.bfloat16),
                preferred_element_type=jnp.float32) + b1
    m = h.mean(0, keepdims=True)
    v = ((h - m) ** 2).mean(0, keepdims=True)
    hn = (h - m) * jax.lax.rsqrt(v + eps) * gamma + beta
    hr = jnp.maximum(hn, 0.0)
    return jnp.dot(hr.astype(jnp.bfloat16), w2.astype(jnp.bfloat16),
                   preferred_element_type=jnp.float32) + b2


if __name__ == "__main__":
    # Small shapes consistent with MLPHead(in_channels=32, mlp_hidden=2, projection_size=16)
    B, C, MLP_HIDDEN, P = 8, 32, 2, 16

    key = jax.random.PRNGKey(0)
    kx, kp, kx2 = jax.random.split(key, 3)
    x = jax.random.normal(kx, (B, C), jnp.float32)

    w1, b1, gamma, beta, w2, b2 = make_params(kp, C, MLP_HIDDEN, P)
    params = prepare_params(w1, gamma, beta, w2, b2)   # padded/cast once, reused below
    params = jax.block_until_ready(params)

    out = mlp_head_forward(x, *params, out_dim=P)
    jax.block_until_ready(out)
    assert out.shape == (B, P)

    ref = _reference(x, w1, b1, gamma, beta, w2, b2)
    err = jnp.abs(out - ref).max()
    assert jnp.allclose(out, ref, atol=3e-2, rtol=3e-2), f"mismatch, max err={err}"

    # Multi-tile case (exercises batch tiling, ragged zero-row padding and the
    # Chan stats combine: B=40, TB=16 -> 3 tiles, last tile half-empty).
    B2 = 40
    x2 = jax.random.normal(kx2, (B2, C), jnp.float32)
    out2 = mlp_head_forward(x2, *params, out_dim=P, batch_tile=16)
    jax.block_until_ready(out2)
    ref2 = _reference(x2, w1, b1, gamma, beta, w2, b2)
    err2 = jnp.abs(out2 - ref2).max()
    assert out2.shape == (B2, P)
    assert jnp.allclose(out2, ref2, atol=3e-2, rtol=3e-2), f"mismatch, max err={err2}"

    print("KERNEL_OK")
</pallas_src>

<mosaic_0001>
module attributes {stable_mosaic.version = 11 : i64} {
  func.func @_linear1_stats_kernel(%arg0: i32, %arg1: memref<8x128xf32, #tpu.memory_space<vmem>>, %arg2: memref<128x128xbf16, #tpu.memory_space<vmem>>, %arg3: memref<8x128xbf16, #tpu.memory_space<vmem>>, %arg4: memref<1x8x128xf32, #tpu.memory_space<vmem>>) attributes {dimension_semantics = [#tpu.dimension_semantics<parallel>], iteration_bounds = array<i64: 1>, scalar_prefetch = 0 : i64, scratch_operands = 0 : i64, tpu.core_type = #tpu.core_type<tc>, window_params = [{transform_indices = @transform_0, window_bounds = array<i64: 8, 128>}, {pipeline_mode = #tpu.pipeline_mode<synchronous>, transform_indices = @transform_1, window_bounds = array<i64: 128, 128>}, {transform_indices = @transform_2, window_bounds = array<i64: 8, 128>}, {transform_indices = @transform_3, window_bounds = array<i64: 1, 8, 128>}]} {
    %c0 = arith.constant 0 : index
    %c0_0 = arith.constant 0 : index
    %0 = vector.load %arg1[%c0, %c0_0] : memref<8x128xf32, #tpu.memory_space<vmem>>, vector<8x128xf32>
    %1 = arith.truncf %0 : vector<8x128xf32> to vector<8x128xbf16>
    %c0_1 = arith.constant 0 : index
    %c0_2 = arith.constant 0 : index
    %2 = vector.load %arg2[%c0_1, %c0_2] : memref<128x128xbf16, #tpu.memory_space<vmem>>, vector<128x128xbf16>
    %cst = arith.constant dense<0.000000e+00> : vector<8x128xf32>
    %3 = tpu.matmul %1, %2, %cst {dimension_numbers = #tpu.dot_dimension_numbers<[1], [0], [0], [1], [0, 0, 1, 1], [], []>} : vector<8x128xbf16>, vector<128x128xbf16>, vector<8x128xf32> -> vector<8x128xf32>
    %c8_i32 = arith.constant 8 : i32
    %4 = arith.muli %arg0, %c8_i32 : i32
    %c8_i32_3 = arith.constant 8 : i32
    %5 = arith.subi %c8_i32_3, %4 : i32
    %c8_i32_4 = arith.constant 8 : i32
    %6 = arith.minsi %c8_i32_4, %5 : i32
    %7 = arith.sitofp %6 : i32 to f32
    %cst_5 = arith.constant dense<0.000000e+00> : vector<128xf32>
    %8 = vector.multi_reduction <add>, %3, %cst_5 [0] : vector<8x128xf32> to vector<128xf32>
    %9 = vector.shape_cast %8 : vector<128xf32> to vector<1x128xf32>
    %10 = vector.broadcast %7 : f32 to vector<1x128xf32>
    %11 = arith.divf %9, %10 : vector<1x128xf32>
    %12 = tpu.iota {dimensions = array<i32: 0>} : vector<8x128xi32>
    %13 = vector.broadcast %6 : i32 to vector<8x128xi32>
    %14 = arith.cmpi slt, %12, %13 : vector<8x128xi32>
    %15 = arith.extui %14 : vector<8x128xi1> to vector<8x128xi32>
    %16 = arith.sitofp %15 : vector<8x128xi32> to vector<8x128xf32>
    %17 = vector.broadcast %11 : vector<1x128xf32> to vector<8x128xf32>
    %18 = arith.subf %3, %17 : vector<8x128xf32>
    %19 = arith.mulf %18, %16 : vector<8x128xf32>
    %20 = arith.mulf %19, %19 : vector<8x128xf32>
    %cst_6 = arith.constant dense<0.000000e+00> : vector<128xf32>
    %21 = vector.multi_reduction <add>, %20, %cst_6 [0] : vector<8x128xf32> to vector<128xf32>
    %22 = vector.shape_cast %21 : vector<128xf32> to vector<1x128xf32>
    %cst_7 = arith.constant 0.000000e+00 : f32
    %23 = vector.broadcast %cst_7 : f32 to vector<6x128xf32>
    %24 = tpu.concatenate %9, %22, %23 in 0 : vector<1x128xf32>, vector<1x128xf32>, vector<6x128xf32> -> vector<8x128xf32>
    %25 = vector.shape_cast %24 : vector<8x128xf32> to vector<1x8x128xf32>
    %c0_8 = arith.constant 0 : index
    %c0_9 = arith.constant 0 : index
    %c0_10 = arith.constant 0 : index
    %26 = vector.load %arg4[%c0_8, %c0_9, %c0_10] : memref<1x8x128xf32, #tpu.memory_space<vmem>>, vector<1x8x128xf32>
    tpu.vector_store %arg4[%c0_8, %c0_9, %c0_10], %25 {strides = array<i32>} : memref<1x8x128xf32, #tpu.memory_space<vmem>>, vector<1x8x128xf32>,
    %27 = arith.truncf %3 : vector<8x128xf32> to vector<8x128xbf16>
    %c0_11 = arith.constant 0 : index
    %c0_12 = arith.constant 0 : index
    %28 = vector.load %arg3[%c0_11, %c0_12] : memref<8x128xbf16, #tpu.memory_space<vmem>>, vector<8x128xbf16>
    tpu.vector_store %arg3[%c0_11, %c0_12], %27 {strides = array<i32>} : memref<8x128xbf16, #tpu.memory_space<vmem>>, vector<8x128xbf16>,
    return
  }
  func.func @transform_0(%arg0: i32) -> (i32, i32) {
    %c0_i32 = arith.constant 0 : i32
    %c0_i32_0 = arith.constant 0 : i32
    return %arg0, %c0_i32 : i32, i32
  }
  func.func @transform_1(%arg0: i32) -> (i32, i32) {
    %c0_i32 = arith.constant 0 : i32
    %c0_i32_0 = arith.constant 0 : i32
    %c0_i32_1 = arith.constant 0 : i32
    return %c0_i32, %c0_i32_0 : i32, i32
  }
  func.func @transform_2(%arg0: i32) -> (i32, i32) {
    %c0_i32 = arith.constant 0 : i32
    %c0_i32_0 = arith.constant 0 : i32
    return %arg0, %c0_i32 : i32, i32
  }
  func.func @transform_3(%arg0: i32) -> (i32, i32, i32) {
    %c0_i32 = arith.constant 0 : i32
    %c0_i32_0 = arith.constant 0 : i32
    %c0_i32_1 = arith.constant 0 : i32
    return %arg0, %c0_i32, %c0_i32_0 : i32, i32, i32
  }
}

module attributes {stable_mosaic.version = 11 : i64} {
  func.func @_bn_relu_linear2_kernel(%arg0: i32, %arg1: memref<8x128xbf16, #tpu.memory_space<vmem>>, %arg2: memref<1x128xf32, #tpu.memory_space<vmem>>, %arg3: memref<1x128xf32, #tpu.memory_space<vmem>>, %arg4: memref<128x128xbf16, #tpu.memory_space<vmem>>, %arg5: memref<1x128xf32, #tpu.memory_space<vmem>>, %arg6: memref<8x128xf32, #tpu.memory_space<vmem>>) attributes {dimension_semantics = [#tpu.dimension_semantics<parallel>], iteration_bounds = array<i64: 1>, scalar_prefetch = 0 : i64, scratch_operands = 0 : i64, tpu.core_type = #tpu.core_type<tc>, window_params = [{transform_indices = @transform_0, window_bounds = array<i64: 8, 128>}, {pipeline_mode = #tpu.pipeline_mode<synchronous>, transform_indices = @transform_1, window_bounds = array<i64: 1, 128>}, {pipeline_mode = #tpu.pipeline_mode<synchronous>, transform_indices = @transform_2, window_bounds = array<i64: 1, 128>}, {pipeline_mode = #tpu.pipeline_mode<synchronous>, transform_indices = @transform_3, window_bounds = array<i64: 128, 128>}, {pipeline_mode = #tpu.pipeline_mode<synchronous>, transform_indices = @transform_4, window_bounds = array<i64: 1, 128>}, {transform_indices = @transform_5, window_bounds = array<i64: 8, 128>}]} {
    %c0 = arith.constant 0 : index
    %c0_0 = arith.constant 0 : index
    %0 = vector.load %arg1[%c0, %c0_0] : memref<8x128xbf16, #tpu.memory_space<vmem>>, vector<8x128xbf16>
    %1 = arith.extf %0 : vector<8x128xbf16> to vector<8x128xf32>
    %c0_1 = arith.constant 0 : index
    %c0_2 = arith.constant 0 : index
    %2 = vector.load %arg2[%c0_1, %c0_2] : memref<1x128xf32, #tpu.memory_space<vmem>>, vector<1x128xf32>
    %3 = vector.broadcast %2 : vector<1x128xf32> to vector<8x128xf32>
    %4 = arith.mulf %1, %3 : vector<8x128xf32>
    %c0_3 = arith.constant 0 : index
    %c0_4 = arith.constant 0 : index
    %5 = vector.load %arg3[%c0_3, %c0_4] : memref<1x128xf32, #tpu.memory_space<vmem>>, vector<1x128xf32>
    %6 = vector.broadcast %5 : vector<1x128xf32> to vector<8x128xf32>
    %7 = arith.addf %4, %6 : vector<8x128xf32>
    %cst = arith.constant 0.000000e+00 : f32
    %8 = vector.broadcast %cst : f32 to vector<8x128xf32>
    %9 = arith.maximumf %7, %8 : vector<8x128xf32>
    %10 = arith.truncf %9 : vector<8x128xf32> to vector<8x128xbf16>
    %c0_5 = arith.constant 0 : index
    %c0_6 = arith.constant 0 : index
    %11 = vector.load %arg4[%c0_5, %c0_6] : memref<128x128xbf16, #tpu.memory_space<vmem>>, vector<128x128xbf16>
    %cst_7 = arith.constant dense<0.000000e+00> : vector<8x128xf32>
    %12 = tpu.matmul %10, %11, %cst_7 {dimension_numbers = #tpu.dot_dimension_numbers<[1], [0], [0], [1], [0, 0, 1, 1], [], []>} : vector<8x128xbf16>, vector<128x128xbf16>, vector<8x128xf32> -> vector<8x128xf32>
    %c0_8 = arith.constant 0 : index
    %c0_9 = arith.constant 0 : index
    %13 = vector.load %arg5[%c0_8, %c0_9] : memref<1x128xf32, #tpu.memory_space<vmem>>, vector<1x128xf32>
    %14 = vector.broadcast %13 : vector<1x128xf32> to vector<8x128xf32>
    %15 = arith.addf %12, %14 : vector<8x128xf32>
    %c0_10 = arith.constant 0 : index
    %c0_11 = arith.constant 0 : index
    %16 = vector.load %arg6[%c0_10, %c0_11] : memref<8x128xf32, #tpu.memory_space<vmem>>, vector<8x128xf32>
    tpu.vector_store %arg6[%c0_10, %c0_11], %15 {strides = array<i32>} : memref<8x128xf32, #tpu.memory_space<vmem>>, vector<8x128xf32>,
    return
  }
  func.func @transform_0(%arg0: i32) -> (i32, i32) {
    %c0_i32 = arith.constant 0 : i32
    %c0_i32_0 = arith.constant 0 : i32
    return %arg0, %c0_i32 : i32, i32
  }
  func.func @transform_1(%arg0: i32) -> (i32, i32) {
    %c0_i32 = arith.constant 0 : i32
    %c0_i32_0 = arith.constant 0 : i32
    %c0_i32_1 = arith.constant 0 : i32
    return %c0_i32, %c0_i32_0 : i32, i32
  }
  func.func @transform_2(%arg0: i32) -> (i32, i32) {
    %c0_i32 = arith.constant 0 : i32
    %c0_i32_0 = arith.constant 0 : i32
    %c0_i32_1 = arith.constant 0 : i32
    return %c0_i32, %c0_i32_0 : i32, i32
  }
  func.func @transform_3(%arg0: i32) -> (i32, i32) {
    %c0_i32 = arith.constant 0 : i32
    %c0_i32_0 = arith.constant 0 : i32
    %c0_i32_1 = arith.constant 0 : i32
    return %c0_i32, %c0_i32_0 : i32, i32
  }
  func.func @transform_4(%arg0: i32) -> (i32, i32) {
    %c0_i32 = arith.constant 0 : i32
    %c0_i32_0 = arith.constant 0 : i32
    %c0_i32_1 = arith.constant 0 : i32
    return %c0_i32, %c0_i32_0 : i32, i32
  }
  func.func @transform_5(%arg0: i32) -> (i32, i32) {
    %c0_i32 = arith.constant 0 : i32
    %c0_i32_0 = arith.constant 0 : i32
    return %arg0, %c0_i32 : i32, i32
  }
}

</mosaic_0001>

<llo_original>
// kernel: mlp_head_forward.2
$region0: #{mlp_head_forward.2}
  #allocation0 [shape = 'u32[]', space=smem, size = 0x4, offset = 0x4, fixed_abs, tag = 'smem constant byte address 0x4 - core index']
  #allocation1 [shape = 'u32[144,128]{1,0:T(1,128)}', space=vmem, size = 0x12000, scoped, tag = 'internal scratch']
  %s0 = inlined_call_operand.vmem [shape: f32[8,128], index: 0, kind: input, shape index: {}]
  %s1 = inlined_call_operand.hbm [shape: bf16[128,128], index: 1, kind: input, shape index: {}]
  %s2 = inlined_call_operand.vmem [shape: bf16[8,128], index: 2, kind: output, shape index: {0}]
  %s3 = inlined_call_operand.vmem [shape: f32[1,8,128], index: 3, kind: output, shape index: {1}]
  %4 = xla_tuple %s2, %s3
  %s5 = sld [smem:[#allocation0]]
  $region30: #{mlp_head_forward.2} parent=0
    _
  %s7 = ssub.s32 1, %s5
  %s8 = scalar_select 0, %s7, %s5
  $region1: #{mlp_head_forward.2} parent=0
    #allocation2 [shape = 'u8[32768]{0}', space=vmem, size = 0x8000, scoped, tag = 'input window, operand 1, single buffered']
    #allocation3 [shape = 's32[1]{0}', space=sflag, size = 0x4, scoped, tag = 'scoped memory for mlp_head_forward.2']
    %9 = vsyncpa [#allocation3], 0
    // Predicated region
    $region2: #{mlp_head_forward.2} parent=1 // pred_check
      _
    $region3: #{mlp_head_forward.2} parent=1 // pred_check_branch
      %11 = sbr.rel (0) target = $region5
    $region4: #{mlp_head_forward.2} parent=1 // pred_region
      _
    $region5: #{mlp_head_forward.2} parent=1 // pred_fallthru
      _
    // Predicated region
    $region6: #{mlp_head_forward.2} parent=1 // pred_check
      _
    $region7: #{mlp_head_forward.2} parent=1 // pred_check_branch
      %13 = sbr.rel (0) target = $region9
    $region8: #{mlp_head_forward.2} parent=1 // pred_region
      %s15 = ssub.s32 1024, 1024
      %16 = vsyncadd [#allocation3], %s15
      %s17 = sshll.u32 [#allocation2], 4
      %s18 = int_to_ptr.vmem [resolvable:$true] %s17
      %23 = dma.hbm_to_vmem [thread:$0]  %s1, 1024, %s18, [#allocation3], 64, 64, 4
    $region9: #{mlp_head_forward.2} parent=1 // pred_fallthru
      _
    // Predicated region
    $region10: #{mlp_head_forward.2} parent=1 // pred_check
      _
    $region11: #{mlp_head_forward.2} parent=1 // pred_check_branch
      %25 = sbr.rel (0) target = $region13
    $region12: #{mlp_head_forward.2} parent=1 // pred_region
      %26 = dma.done [#allocation3], 1024
    $region13: #{mlp_head_forward.2} parent=1 // pred_fallthru
      _
    %v28 = vld [vmem:[%s0] sm:$0xff]
    %v29 = vpack.c.bf16 %v28, %v28
    %v30 = vld [vmem:[#allocation2] sm:$0xf]
    %v31 = vld [vmem:[#allocation2 + $0x4] sm:$0xf]
    %v32 = vld [vmem:[#allocation2 + $0x8] sm:$0xf]
    %v33 = vld [vmem:[#allocation2 + $0xc] sm:$0xf]
    %v34 = vld [vmem:[#allocation2 + $0x10] sm:$0xf]
    %v35 = vld [vmem:[#allocation2 + $0x14] sm:$0xf]
    %v36 = vld [vmem:[#allocation2 + $0x18] sm:$0xf]
    %v37 = vld [vmem:[#allocation2 + $0x1c] sm:$0xf]
    %v38 = vld [vmem:[#allocation2 + $0x20] sm:$0xf]
    %v39 = vld [vmem:[#allocation2 + $0x24] sm:$0xf]
    %v40 = vld [vmem:[#allocation2 + $0x28] sm:$0xf]
    %v41 = vld [vmem:[#allocation2 + $0x2c] sm:$0xf]
    %v42 = vld [vmem:[#allocation2 + $0x30] sm:$0xf]
    %v43 = vld [vmem:[#allocation2 + $0x34] sm:$0xf]
    %v44 = vld [vmem:[#allocation2 + $0x38] sm:$0xf]
    %v45 = vld [vmem:[#allocation2 + $0x3c] sm:$0xf]
    %v62 = vunpack.c.l.b16 %v30
    %v63 = vunpack.c.l.b16 %v31
    %v64 = vunpack.c.l.b16 %v32
    %v65 = vunpack.c.l.b16 %v33
    %v66 = vunpack.c.l.b16 %v34
    %v67 = vunpack.c.l.b16 %v35
    %v68 = vunpack.c.l.b16 %v36
    %v69 = vunpack.c.l.b16 %v37
    %v70 = vunpack.c.l.b16 %v38
    %v71 = vunpack.c.l.b16 %v39
    %v72 = vunpack.c.l.b16 %v40
    %v73 = vunpack.c.l.b16 %v41
    %v74 = vunpack.c.l.b16 %v42
    %v75 = vunpack.c.l.b16 %v43
    %v76 = vunpack.c.l.b16 %v44
    %v77 = vunpack.c.l.b16 %v45
    %v78 = vpack.c.b16 %v63, %v62
    %v79 = vpack.c.b16 %v65, %v64
    %v80 = vpack.c.b16 %v67, %v66
    %v81 = vpack.c.b16 %v69, %v68
    %v82 = vpack.c.b16 %v71, %v70
    %v83 = vpack.c.b16 %v73, %v72
    %v84 = vpack.c.b16 %v75, %v74
    %v85 = vpack.c.b16 %v77, %v76
    %94 = vmatprep.subr.bf16.mxu0 0
    %95 = vmatpush1.bf16.msra.mxu0 %v85
    %96 = vmatprep.subr.bf16.mxu0 0
    %97 = vmatpush1.bf16.msra.mxu0 %v84
    %98 = vmatprep.subr.bf16.mxu0 0
    %99 = vmatpush1.bf16.msra.mxu0 %v83
    %100 = vmatprep.subr.bf16.mxu0 0
    %101 = vmatpush1.bf16.msra.mxu0 %v82
    %102 = vmatprep.subr.bf16.mxu0 0
    %103 = vmatpush1.bf16.msra.mxu0 %v81
    %104 = vmatprep.subr.bf16.mxu0 0
    %105 = vmatpush1.bf16.msra.mxu0 %v80
    %106 = vmatprep.subr.bf16.mxu0 0
    %107 = vmatpush1.bf16.msra.mxu0 %v79
    %108 = vmatprep.subr.bf16.mxu0 0
    %109 = vmatpush1.bf16.msra.mxu0 %v78
    %110 = vmatprep.subr.bf16.mxu0 0
    %111 = vmatpush2.bf16.msra.mxu0 0
    %112 = vmatprep.subr.bf16.mxu0 0
    %113 = vmatpush2.bf16.msra.mxu0 0
    %114 = vmatprep.subr.bf16.mxu0 0
    %115 = vmatpush2.bf16.msra.mxu0 0
    %116 = vmatprep.subr.bf16.mxu0 0
    %117 = vmatpush2.bf16.msra.mxu0 0
    %118 = vmatprep.subr.bf16.mxu0 0
    %119 = vmatpush2.bf16.msra.mxu0 0
    %120 = vmatprep.subr.bf16.mxu0 0
    %121 = vmatpush2.bf16.msra.mxu0 0
    %122 = vmatprep.subr.bf16.mxu0 0
    %123 = vmatpush2.bf16.msra.mxu0 0
    %124 = vmatprep.subr.bf16.mxu0 0
    %125 = vmatpush2.bf16.msra.mxu0 0
    %126 = vmatprep.mubr.bf16.mxu0 0
    %127 = vmatmul.mubr.bf16.gmra.mxu0 %v29
    %v128 = vpop.f32.mrf.mxu0
    %v129 = vadd.f32 0.0, %v128
    %v130 = vpop.f32.mrf.mxu0
    %v131 = vpop.f32.mrf.mxu0
    %v132 = vpop.f32.mrf.mxu0
    %133 = vdwg.mxu0
    %s134 = smul.u32 0, 8
    %s135 = ssub.s32 8, %s134
    %p136 = scmp.lt.s32.totalorder %s135, 8
    %s137 = scalar_select %p136, %s135, 8
    %s138 = scvt.s32.f32 %s137
    %v139 = vrot.slane %v129, 4
    %v140 = vadd.f32 %v129, %v139
    %v141 = vrot.slane %v140, 2
    %v142 = vadd.f32 %v140, %v141
    %v143 = vrot.slane %v142, 1
    %v144 = vadd.f32 %v142, %v143
    %v145 = vstv %s138
    %v146 = vrcp.pop %v145
    %v147 = vmul.f32 %v144, %v146
    %v148 = vlaneseq
    %v149 = vshrl.u32 %v148, 7
    %v150 = vstv %s137
    %vm151 = vcmp.lt.s32.totalorder %v149, %v150
    %v152 = vsel %vm151, 1, 0
    %v153 = vcvt.s32.f32 %v152
    %v154 = vsub.f32 %v129, %v147
    %v155 = vmul.f32 %v154, %v153
    %v156 = vmul.f32 %v155, %v155
    %v157 = vrot.slane %v156, 4
    %v158 = vadd.f32 %v156, %v157
    %v159 = vrot.slane %v158, 2
    %v160 = vadd.f32 %v158, %v159
    %v161 = vrot.slane %v160, 1
    %v162 = vadd.f32 %v160, %v161
    %vm163 = vcmask 1040384
    %v164 = vsel %vm163, %v144, %v162
    %vm165 = vcmask 1041408
    %v166 = vsel %vm165, %v164, 0.0
    %167 = vst [vmem:[%s3] sm:$0xff] %v166
    %v168 = vpack.c.bf16 %v129, %v129
    %169 = vst [vmem:[%s2] sm:$0xf] %v168
    // Predicated region
    $region14: #{mlp_head_forward.2} parent=1 // pred_check
      _
    $region15: #{mlp_head_forward.2} parent=1 // pred_check_branch
      %171 = sbr.rel (0) target = $region17
    $region16: #{mlp_head_forward.2} parent=1 // pred_region
      _
    $region17: #{mlp_head_forward.2} parent=1 // pred_fallthru
      _
    // Predicated region
    $region18: #{mlp_head_forward.2} parent=1 // pred_check
      _
    $region19: #{mlp_head_forward.2} parent=1 // pred_check_branch
      %173 = sbr.rel (0) target = $region21
    $region20: #{mlp_head_forward.2} parent=1 // pred_region
      _
    $region21: #{mlp_head_forward.2} parent=1 // pred_fallthru
      _
    // Predicated region
    $region22: #{mlp_head_forward.2} parent=1 // pred_check
      _
    $region23: #{mlp_head_forward.2} parent=1 // pred_check_branch
      %175 = sbr.rel (0) target = $region25
    $region24: #{mlp_head_forward.2} parent=1 // pred_region
      _
    $region25: #{mlp_head_forward.2} parent=1 // pred_fallthru
      _
    // Predicated region
    $region26: #{mlp_head_forward.2} parent=1 // pred_check
      _
    $region27: #{mlp_head_forward.2} parent=1 // pred_check_branch
      %177 = sbr.rel (0) target = $region29
    $region28: #{mlp_head_forward.2} parent=1 // pred_region
      _
    $region29: #{mlp_head_forward.2} parent=1 // pred_fallthru
      _
    %178 = vsyncpa [#allocation3], 1

// kernel: mlp_head_forward.3
$region0: #{mlp_head_forward.3}
  #allocation0 [shape = 'u32[]', space=smem, size = 0x4, offset = 0x4, fixed_abs, tag = 'smem constant byte address 0x4 - core index']
  #allocation1 [shape = 'u32[144,128]{1,0:T(1,128)}', space=vmem, size = 0x12000, scoped, tag = 'internal scratch']
  %s0 = inlined_call_operand.vmem [shape: bf16[8,128], index: 0, kind: input, shape index: {}]
  %s1 = inlined_call_operand.vmem [shape: f32[1,128], index: 1, kind: input, shape index: {}]
  %s2 = inlined_call_operand.vmem [shape: f32[1,128], index: 2, kind: input, shape index: {}]
  %s3 = inlined_call_operand.vmem [shape: bf16[128,128], index: 3, kind: input, shape index: {}]
  %s4 = inlined_call_operand.vmem [shape: f32[1,128], index: 4, kind: input, shape index: {}]
  %s5 = inlined_call_operand.hbm [shape: f32[8,128], index: 5, kind: output, shape index: {}]
  %s6 = sld [smem:[#allocation0]]
  $region30: #{mlp_head_forward.3} parent=0
    _
  %s8 = ssub.s32 1, %s6
  %s9 = scalar_select 0, %s8, %s6
  $region1: #{mlp_head_forward.3} parent=0
    #allocation2 [shape = 'u8[4096]{0}', space=vmem, size = 0x1000, scoped, tag = 'output window, operand 0, single buffered']
    #allocation3 [shape = 's32[1]{0}', space=sflag, size = 0x4, scoped, tag = 'scoped memory for mlp_head_forward.3']
    %10 = vsyncpa [#allocation3], 0
    // Predicated region
    $region2: #{mlp_head_forward.3} parent=1 // pred_check
      _
    $region3: #{mlp_head_forward.3} parent=1 // pred_check_branch
      %12 = sbr.rel (0) target = $region5
    $region4: #{mlp_head_forward.3} parent=1 // pred_region
      _
    $region5: #{mlp_head_forward.3} parent=1 // pred_fallthru
      _
    // Predicated region
    $region6: #{mlp_head_forward.3} parent=1 // pred_check
      _
    $region7: #{mlp_head_forward.3} parent=1 // pred_check_branch
      %14 = sbr.rel (0) target = $region9
    $region8: #{mlp_head_forward.3} parent=1 // pred_region
      _
    $region9: #{mlp_head_forward.3} parent=1 // pred_fallthru
      _
    // Predicated region
    $region10: #{mlp_head_forward.3} parent=1 // pred_check
      _
    $region11: #{mlp_head_forward.3} parent=1 // pred_check_branch
      %16 = sbr.rel (0) target = $region13
    $region12: #{mlp_head_forward.3} parent=1 // pred_region
      _
    $region13: #{mlp_head_forward.3} parent=1 // pred_fallthru
      _
    // Predicated region
    $region14: #{mlp_head_forward.3} parent=1 // pred_check
      _
    $region15: #{mlp_head_forward.3} parent=1 // pred_check_branch
      %18 = sbr.rel (0) target = $region17
    $region16: #{mlp_head_forward.3} parent=1 // pred_region
      _
    $region17: #{mlp_head_forward.3} parent=1 // pred_fallthru
      _
    // Predicated region
    $region18: #{mlp_head_forward.3} parent=1 // pred_check
      _
    $region19: #{mlp_head_forward.3} parent=1 // pred_check_branch
      %20 = sbr.rel (0) target = $region21
    $region20: #{mlp_head_forward.3} parent=1 // pred_region
      _
    $region21: #{mlp_head_forward.3} parent=1 // pred_fallthru
      _
    %v22 = vld [vmem:[%s0] sm:$0xf]
    %v23 = vunpack.c.l.bf16 %v22
    %v24 = vld [vmem:[%s1] sm:$0x1]
    %v26 = vlaneseq
    %v27 = vshrl.u32 %v26, 7
    %v28 = vsub.s32 0, %v27
    %v29 = vrot.slane %v24, %v28
    %v31 = vmul.f32 %v23, %v29
    %v32 = vld [vmem:[%s2] sm:$0x1]
    %v34 = vlaneseq
    %v35 = vshrl.u32 %v34, 7
    %v36 = vsub.s32 0, %v35
    %v37 = vrot.slane %v32, %v36
    %v39 = vadd.f32 %v31, %v37
    %v40 = vmax.f32 %v39, 0.0
    %v41 = vpack.c.bf16 %v40, %v40
    %v42 = vld [vmem:[%s3] sm:$0xf]
    %v43 = vld [vmem:[%s3 + $0x4] sm:$0xf]
    %v44 = vld [vmem:[%s3 + $0x8] sm:$0xf]
    %v45 = vld [vmem:[%s3 + $0xc] sm:$0xf]
    %v46 = vld [vmem:[%s3 + $0x10] sm:$0xf]
    %v47 = vld [vmem:[%s3 + $0x14] sm:$0xf]
    %v48 = vld [vmem:[%s3 + $0x18] sm:$0xf]
    %v49 = vld [vmem:[%s3 + $0x1c] sm:$0xf]
    %v50 = vld [vmem:[%s3 + $0x20] sm:$0xf]
    %v51 = vld [vmem:[%s3 + $0x24] sm:$0xf]
    %v52 = vld [vmem:[%s3 + $0x28] sm:$0xf]
    %v53 = vld [vmem:[%s3 + $0x2c] sm:$0xf]
    %v54 = vld [vmem:[%s3 + $0x30] sm:$0xf]
    %v55 = vld [vmem:[%s3 + $0x34] sm:$0xf]
    %v56 = vld [vmem:[%s3 + $0x38] sm:$0xf]
    %v57 = vld [vmem:[%s3 + $0x3c] sm:$0xf]
    %v58 = vld [vmem:[%s4] sm:$0x1]
    %v60 = vlaneseq
    %v61 = vshrl.u32 %v60, 7
    %v62 = vsub.s32 0, %v61
    %v63 = vrot.slane %v58, %v62
    %v81 = vunpack.c.l.b16 %v42
    %v82 = vunpack.c.l.b16 %v43
    %v83 = vunpack.c.l.b16 %v44
    %v84 = vunpack.c.l.b16 %v45
    %v85 = vunpack.c.l.b16 %v46
    %v86 = vunpack.c.l.b16 %v47
    %v87 = vunpack.c.l.b16 %v48
    %v88 = vunpack.c.l.b16 %v49
    %v89 = vunpack.c.l.b16 %v50
    %v90 = vunpack.c.l.b16 %v51
    %v91 = vunpack.c.l.b16 %v52
    %v92 = vunpack.c.l.b16 %v53
    %v93 = vunpack.c.l.b16 %v54
    %v94 = vunpack.c.l.b16 %v55
    %v95 = vunpack.c.l.b16 %v56
    %v96 = vunpack.c.l.b16 %v57
    %v97 = vpack.c.b16 %v82, %v81
    %v98 = vpack.c.b16 %v84, %v83
    %v99 = vpack.c.b16 %v86, %v85
    %v100 = vpack.c.b16 %v88, %v87
    %v101 = vpack.c.b16 %v90, %v89
    %v102 = vpack.c.b16 %v92, %v91
    %v103 = vpack.c.b16 %v94, %v93
    %v104 = vpack.c.b16 %v96, %v95
    %113 = vmatprep.subr.bf16.mxu0 0
    %114 = vmatpush1.bf16.msra.mxu0 %v104
    %115 = vmatprep.subr.bf16.mxu0 0
    %116 = vmatpush1.bf16.msra.mxu0 %v103
    %117 = vmatprep.subr.bf16.mxu0 0
    %118 = vmatpush1.bf16.msra.mxu0 %v102
    %119 = vmatprep.subr.bf16.mxu0 0
    %120 = vmatpush1.bf16.msra.mxu0 %v101
    %121 = vmatprep.subr.bf16.mxu0 0
    %122 = vmatpush1.bf16.msra.mxu0 %v100
    %123 = vmatprep.subr.bf16.mxu0 0
    %124 = vmatpush1.bf16.msra.mxu0 %v99
    %125 = vmatprep.subr.bf16.mxu0 0
    %126 = vmatpush1.bf16.msra.mxu0 %v98
    %127 = vmatprep.subr.bf16.mxu0 0
    %128 = vmatpush1.bf16.msra.mxu0 %v97
    %129 = vmatprep.subr.bf16.mxu0 0
    %130 = vmatpush2.bf16.msra.mxu0 0
    %131 = vmatprep.subr.bf16.mxu0 0
    %132 = vmatpush2.bf16.msra.mxu0 0
    %133 = vmatprep.subr.bf16.mxu0 0
    %134 = vmatpush2.bf16.msra.mxu0 0
    %135 = vmatprep.subr.bf16.mxu0 0
    %136 = vmatpush2.bf16.msra.mxu0 0
    %137 = vmatprep.subr.bf16.mxu0 0
    %138 = vmatpush2.bf16.msra.mxu0 0
    %139 = vmatprep.subr.bf16.mxu0 0
    %140 = vmatpush2.bf16.msra.mxu0 0
    %141 = vmatprep.subr.bf16.mxu0 0
    %142 = vmatpush2.bf16.msra.mxu0 0
    %143 = vmatprep.subr.bf16.mxu0 0
    %144 = vmatpush2.bf16.msra.mxu0 0
    %145 = vmatprep.mubr.bf16.mxu0 0
    %146 = vmatmul.mubr.bf16.gmra.mxu0 %v41
    %v147 = vpop.f32.mrf.mxu0
    %v148 = vadd.f32 %v63, %v147
    %v149 = vpop.f32.mrf.mxu0
    %v150 = vpop.f32.mrf.mxu0
    %v151 = vpop.f32.mrf.mxu0
    %152 = vdwg.mxu0
    %153 = vst [vmem:[#allocation2] sm:$0xff] %v148
    // Predicated region
    $region22: #{mlp_head_forward.3} parent=1 // pred_check
      _
    $region23: #{mlp_head_forward.3} parent=1 // pred_check_branch
      %155 = sbr.rel (0) target = $region25
    $region24: #{mlp_head_forward.3} parent=1 // pred_region
      %s157 = ssub.s32 128, 128
      %158 = vsyncadd [#allocation3], %s157
      %s160 = sshll.u32 [#allocation2], 4
      %s161 = int_to_ptr.vmem [resolvable:$true] %s160
      %163 = dma.vmem_to_hbm [thread:$0]  %s161, 128, %s5, [#allocation3]
    $region25: #{mlp_head_forward.3} parent=1 // pred_fallthru
      _
    // Predicated region
    $region26: #{mlp_head_forward.3} parent=1 // pred_check
      _
    $region27: #{mlp_head_forward.3} parent=1 // pred_check_branch
      %165 = sbr.rel (0) target = $region29
    $region28: #{mlp_head_forward.3} parent=1 // pred_region
      %166 = dma.done [#allocation3], 128
    $region29: #{mlp_head_forward.3} parent=1 // pred_fallthru
      _
    %167 = vsyncpa [#allocation3], 1

</llo_original>
